<compile_context>
chip_gen: v6e
topology: v6e:2x2x1
jax: 0.10.0
libtpu: 0.0.40
codegen_flags: <defaults>
</compile_context>

<pallas_src>
import jax
import jax.numpy as jnp
from jax import lax
from jax.experimental import pallas as pl
from jax.experimental.pallas import tpu as pltpu

GUMBEL_BETA = 0.01
EULER_GAMMA = 0.5772156649015329


def _round_up(x, m):
    return (x + m - 1) // m * m


def _hge_kge_kernel(head_ref, tail_ref, ridx_ref, table_ref, out_ref):
    n_rel = table_ref.shape[0]
    R = table_ref.shape[-1] // 4
    TB = head_ref.shape[0]

    beta = jnp.float32(GUMBEL_BETA)
    inv_beta = jnp.float32(1.0 / GUMBEL_BETA)
    shift = jnp.float32(2.0 * EULER_GAMMA * GUMBEL_BETA)
    eps = jnp.float32(jnp.finfo(jnp.float32).tiny)

    # Cast in-kernel (no-op for f32 inputs; enables bf16 HBM storage upstream
    # without a wrapper copy).
    head = head_ref[...].astype(jnp.float32)
    tail = tail_ref[...].astype(jnp.float32)

    # In-kernel relation gather: one_hot(idx) @ stacked_tables on the (idle)
    # MXU.  Row-local, so garbage rows in a clipped edge block stay local.
    # TODO(synk): for n_relation in the thousands switch to a scalar-prefetched
    # index + HBM-resident table (pl.ANY) with per-row DMA gather; the one-hot
    # tensor and resident table grow linearly in VMEM.
    idx = ridx_ref[...]                                              # (TB, 1) i32
    one_hot = (idx == lax.broadcasted_iota(jnp.int32, (TB, n_rel), 1)
               ).astype(jnp.float32)                                 # (TB, n_rel)
    rel = jnp.dot(one_hot, table_ref[...],
                  preferred_element_type=jnp.float32)                # (TB, 4R)
    th = rel[:, 0 * R:1 * R]
    sh = rel[:, 1 * R:2 * R]
    tt = rel[:, 2 * R:3 * R]
    st = rel[:, 3 * R:4 * R]

    # get_hyperr + transform_{head,tail}_hyperr
    min_h = head[:, :R] + th
    max_h = min_h + jnp.exp(head[:, R:]) * sh
    min_t = tail[:, :R] + tt
    delta_t = jnp.exp(tail[:, R:]) * st
    max_t = min_t + delta_t

    # Gumbel (logsumexp) smoothed intersection.  With max/min factored out one
    # LSE term is exp(0)=1:
    #   lse_min = max(a,b) + beta*log1p(exp(-|a-b|/beta))   (>= max, clamp-free)
    #   lse_max = min(a,b) - beta*log1p(exp(-|a-b|/beta))   (<= min, clamp-free)
    def gumbel_corr(d):
        return beta * jnp.log1p(jnp.exp(-jnp.abs(d) * inv_beta))

    i_min = jnp.maximum(min_h, min_t) + gumbel_corr(min_h - min_t)
    i_max = jnp.minimum(max_h, max_t) - gumbel_corr(max_h - max_t)
    delta_i = i_max - i_min

    # log_volumes: sum(log(clamp_min(softplus(delta - 2*gamma*beta), tiny)))
    # softplus written explicitly (max + log1p(exp(-|x|))) to avoid the extra
    # inf/nan select plumbing of jnp.logaddexp on the EUP-bound path.
    def log_softplus_clamped(x):
        sp = jnp.maximum(x, 0.0) + jnp.log1p(jnp.exp(-jnp.abs(x)))
        return jnp.log(jnp.maximum(sp, eps))

    lv_i = jnp.sum(log_softplus_clamped(delta_i - shift), axis=-1, keepdims=True)
    lv_t = jnp.sum(log_softplus_clamped(delta_t - shift), axis=-1, keepdims=True)

    # Exact divide (not approx reciprocal): ratio of log-volumes can be small.
    out_ref[...] = lv_i / lv_t


def stack_relation_tables(params):
    """Stack the 4 relation parameter tables once -> [n_relation, 4R] f32."""
    return jnp.concatenate(
        [params["rel_trans_for_head"], params["rel_scale_for_head"],
         params["rel_trans_for_tail"], params["rel_scale_for_tail"]],
        axis=1).astype(jnp.float32)


def _vmem_bytes_estimate(tb, dim, r, n_rel):
    f32 = 4
    pipelined = 2 * (2 * tb * dim + tb + tb) * f32       # head+tail (dbl-buf), ridx, out
    table = 2 * n_rel * 4 * r * f32                      # resident relation table
    temps = (16 * tb * r + tb * 4 * r + tb * n_rel) * f32  # live elementwise temps
    return pipelined + table + temps


def _pick_tb(B, dim, r, n_rel, block_b):
    # >= 2 grid steps whenever B > 8 (v7x: both TensorCores active on the
    # "parallel" batch axis); multiple of 8 for sublane alignment.
    tb = min(block_b, _round_up(max(pl.cdiv(B, 2), 1), 8))
    while tb > 8 and _vmem_bytes_estimate(tb, dim, r, n_rel) > 48 * 2**20:
        tb = _round_up(max(tb // 2, 8), 8)
    return tb


def hge_kge_forward(head_embeddings, relation_idx, tail_embeddings,
                    params=None, *, table=None, block_b=2048):
    """JAX wrapper mirroring HGE_KGE.forward.

    Returns (pos_predictions [B], head_embeddings, tail_embeddings).
    `table` may be precomputed once via stack_relation_tables(params).
    """
    B, dim = head_embeddings.shape
    R = dim // 2
    if table is None:
        table = stack_relation_tables(params)
    n_relation = table.shape[0]

    TB = _pick_tb(B, dim, R, n_relation, block_b)
    grid = (pl.cdiv(B, TB),)

    # Only the tiny index column gets a wrapper-side copy; head/tail go to the
    # kernel untouched (no pad, no astype) -- Pallas clips the edge block.
    ridx2 = relation_idx.astype(jnp.int32).reshape(B, 1)

    vmem_limit = int(min(max(1.25 * _vmem_bytes_estimate(TB, dim, R, n_relation),
                             16 * 2**20), 64 * 2**20))

    cost = pl.CostEstimate(
        flops=2 * B * n_relation * 4 * R + 40 * B * R,
        transcendentals=12 * B * R,
        bytes_accessed=(2 * B * dim + B + n_relation * 4 * R) * 4 + B * 4,
    )

    out = pl.pallas_call(
        _hge_kge_kernel,
        out_shape=jax.ShapeDtypeStruct((B, 1), jnp.float32),
        grid_spec=pltpu.PrefetchScalarGridSpec(
            num_scalar_prefetch=0,
            grid=grid,
            in_specs=[
                pl.BlockSpec((TB, dim), lambda i: (i, 0)),            # head
                pl.BlockSpec((TB, dim), lambda i: (i, 0)),            # tail
                pl.BlockSpec((TB, 1), lambda i: (i, 0)),              # rel idx
                pl.BlockSpec((n_relation, 4 * R), lambda i: (0, 0)),  # tables (resident)
            ],
            out_specs=pl.BlockSpec((TB, 1), lambda i: (i, 0)),
        ),
        compiler_params=pltpu.CompilerParams(
            dimension_semantics=("parallel",),   # shards batch across TCs (v7x)
            vmem_limit_bytes=vmem_limit,
        ),
        cost_estimate=cost,
    )(head_embeddings, tail_embeddings, ridx2, table)

    pos_predictions = out[:, 0]
    return pos_predictions, head_embeddings, tail_embeddings


def _reference_forward(head, relation_idx, tail, params):
    """Pure-JAX reference replicating the PyTorch semantics."""
    dim = head.shape[1]
    R = dim // 2
    beta = GUMBEL_BETA

    def make_box(emb, trans, scale):
        mn = emb[:, :R] + trans
        delta = jnp.exp(emb[:, R:]) * scale
        mx = mn + delta
        return mn, mx, delta

    th = params["rel_trans_for_head"][relation_idx]
    sh = params["rel_scale_for_head"][relation_idx]
    tt = params["rel_trans_for_tail"][relation_idx]
    st = params["rel_scale_for_tail"][relation_idx]

    min_h, max_h, _ = make_box(head, th, sh)
    min_t, max_t, delta_t = make_box(tail, tt, st)

    lse_min = beta * jax.scipy.special.logsumexp(
        jnp.stack((min_h / beta, min_t / beta)), axis=0)
    i_min = jnp.maximum(lse_min, jnp.maximum(min_h, min_t))
    lse_max = -beta * jax.scipy.special.logsumexp(
        jnp.stack((-max_h / beta, -max_t / beta)), axis=0)
    i_max = jnp.minimum(lse_max, jnp.minimum(max_h, max_t))

    def log_vol(delta):
        shift = 2.0 * EULER_GAMMA * GUMBEL_BETA
        eps = jnp.finfo(jnp.float32).tiny
        return jnp.sum(
            jnp.log(jnp.maximum(jnp.logaddexp(0.0, delta - shift), eps)),
            axis=-1)

    return log_vol(i_max - i_min) / log_vol(delta_t)


if __name__ == "__main__":
    B = 12             # not a multiple of TB -> exercises edge-block clipping
    dim = 256          # rel_dim = 128 -> lane-aligned slices
    n_relation = 16
    rel_dim = dim // 2

    key = jax.random.PRNGKey(0)
    k1, k2, k3, k4, k5, k6, k7 = jax.random.split(key, 7)

    # deterministic parameter init (matches torch init distributions)
    params = {
        "rel_trans_for_head": 0.0001 * jax.random.normal(k1, (n_relation, rel_dim), jnp.float32),
        "rel_scale_for_head": 1.0 + 0.2 * jax.random.normal(k2, (n_relation, rel_dim), jnp.float32),
        "rel_trans_for_tail": 0.0001 * jax.random.normal(k3, (n_relation, rel_dim), jnp.float32),
        "rel_scale_for_tail": 1.0 + 0.2 * jax.random.normal(k4, (n_relation, rel_dim), jnp.float32),
    }

    head_embeddings = jax.random.normal(k5, (B, dim), jnp.float32)
    tail_embeddings = jax.random.normal(k6, (B, dim), jnp.float32)
    relation_idx = jax.random.randint(k7, (B,), 0, n_relation)

    # Stack the relation tables once (hoisted out of the per-call path).
    table = stack_relation_tables(params)

    pos, h_out, t_out = hge_kge_forward(
        head_embeddings, relation_idx, tail_embeddings, table=table)
    pos = jax.block_until_ready(pos)

    ref = _reference_forward(head_embeddings, relation_idx, tail_embeddings, params)
    assert pos.shape == (B,)
    assert jnp.allclose(pos, ref, rtol=1e-4, atol=1e-4), (pos, ref)

    print("KERNEL_OK")
</pallas_src>

<mosaic_0001>
module attributes {stable_mosaic.version = 11 : i64} {
  func.func @_hge_kge_kernel(%arg0: i32, %arg1: memref<8x256xf32, #tpu.memory_space<vmem>>, %arg2: memref<8x256xf32, #tpu.memory_space<vmem>>, %arg3: memref<8x1xi32, #tpu.memory_space<vmem>>, %arg4: memref<16x512xf32, #tpu.memory_space<vmem>>, %arg5: memref<8x1xf32, #tpu.memory_space<vmem>>) attributes {dimension_semantics = [#tpu.dimension_semantics<parallel>], iteration_bounds = array<i64: 2>, scalar_prefetch = 0 : i64, scratch_operands = 0 : i64, tpu.core_type = #tpu.core_type<tc>, window_params = [{transform_indices = @transform_0, window_bounds = array<i64: 8, 256>}, {transform_indices = @transform_1, window_bounds = array<i64: 8, 256>}, {transform_indices = @transform_2, window_bounds = array<i64: 8, 1>}, {pipeline_mode = #tpu.pipeline_mode<synchronous>, transform_indices = @transform_3, window_bounds = array<i64: 16, 512>}, {transform_indices = @transform_4, window_bounds = array<i64: 8, 1>}]} {
    %c0 = arith.constant 0 : index
    %c0_0 = arith.constant 0 : index
    %0 = vector.load %arg1[%c0, %c0_0] : memref<8x256xf32, #tpu.memory_space<vmem>>, vector<8x256xf32>
    %c0_1 = arith.constant 0 : index
    %c0_2 = arith.constant 0 : index
    %1 = vector.load %arg2[%c0_1, %c0_2] : memref<8x256xf32, #tpu.memory_space<vmem>>, vector<8x256xf32>
    %c0_3 = arith.constant 0 : index
    %c0_4 = arith.constant 0 : index
    %2 = vector.load %arg3[%c0_3, %c0_4] : memref<8x1xi32, #tpu.memory_space<vmem>>, vector<8x1xi32>
    %3 = tpu.iota {dimensions = array<i32: 1>} : vector<8x16xi32>
    %4 = vector.broadcast %2 : vector<8x1xi32> to vector<8x16xi32>
    %5 = arith.cmpi eq, %4, %3 : vector<8x16xi32>
    %6 = arith.extui %5 : vector<8x16xi1> to vector<8x16xi32>
    %7 = arith.sitofp %6 : vector<8x16xi32> to vector<8x16xf32>
    %c0_5 = arith.constant 0 : index
    %c0_6 = arith.constant 0 : index
    %8 = vector.load %arg4[%c0_5, %c0_6] : memref<16x512xf32, #tpu.memory_space<vmem>>, vector<16x512xf32>
    %cst = arith.constant dense<0.000000e+00> : vector<8x512xf32>
    %9 = tpu.matmul %7, %8, %cst {dimension_numbers = #tpu.dot_dimension_numbers<[1], [0], [0], [1], [0, 0, 1, 1], [], []>} : vector<8x16xf32>, vector<16x512xf32>, vector<8x512xf32> -> vector<8x512xf32>
    %10 = vector.extract_strided_slice %9 {offsets = [0, 0], sizes = [8, 128], strides = [1, 1]} : vector<8x512xf32> to vector<8x128xf32>
    %11 = vector.extract_strided_slice %9 {offsets = [0, 128], sizes = [8, 128], strides = [1, 1]} : vector<8x512xf32> to vector<8x128xf32>
    %12 = vector.extract_strided_slice %9 {offsets = [0, 256], sizes = [8, 128], strides = [1, 1]} : vector<8x512xf32> to vector<8x128xf32>
    %13 = vector.extract_strided_slice %9 {offsets = [0, 384], sizes = [8, 128], strides = [1, 1]} : vector<8x512xf32> to vector<8x128xf32>
    %14 = vector.extract_strided_slice %0 {offsets = [0, 0], sizes = [8, 128], strides = [1, 1]} : vector<8x256xf32> to vector<8x128xf32>
    %15 = arith.addf %14, %10 : vector<8x128xf32>
    %16 = vector.extract_strided_slice %0 {offsets = [0, 128], sizes = [8, 128], strides = [1, 1]} : vector<8x256xf32> to vector<8x128xf32>
    %17 = math.exp %16 : vector<8x128xf32>
    %18 = arith.mulf %17, %11 : vector<8x128xf32>
    %19 = arith.addf %15, %18 : vector<8x128xf32>
    %20 = vector.extract_strided_slice %1 {offsets = [0, 0], sizes = [8, 128], strides = [1, 1]} : vector<8x256xf32> to vector<8x128xf32>
    %21 = arith.addf %20, %12 : vector<8x128xf32>
    %22 = vector.extract_strided_slice %1 {offsets = [0, 128], sizes = [8, 128], strides = [1, 1]} : vector<8x256xf32> to vector<8x128xf32>
    %23 = math.exp %22 : vector<8x128xf32>
    %24 = arith.mulf %23, %13 : vector<8x128xf32>
    %25 = arith.addf %21, %24 : vector<8x128xf32>
    %26 = arith.maximumf %15, %21 : vector<8x128xf32>
    %27 = arith.subf %15, %21 : vector<8x128xf32>
    %28 = math.absf %27 : vector<8x128xf32>
    %cst_7 = arith.constant 0.000000e+00 : f32
    %29 = vector.broadcast %cst_7 : f32 to vector<8x128xf32>
    %30 = arith.subf %29, %28 : vector<8x128xf32>
    %cst_8 = arith.constant 1.000000e+02 : f32
    %31 = vector.broadcast %cst_8 : f32 to vector<8x128xf32>
    %32 = arith.mulf %30, %31 : vector<8x128xf32>
    %33 = math.exp %32 : vector<8x128xf32>
    %34 = math.log1p %33 : vector<8x128xf32>
    %cst_9 = arith.constant 0.00999999977 : f32
    %35 = vector.broadcast %cst_9 : f32 to vector<8x128xf32>
    %36 = arith.mulf %35, %34 : vector<8x128xf32>
    %37 = arith.addf %26, %36 : vector<8x128xf32>
    %38 = arith.minimumf %19, %25 : vector<8x128xf32>
    %39 = arith.subf %19, %25 : vector<8x128xf32>
    %40 = math.absf %39 : vector<8x128xf32>
    %cst_10 = arith.constant 0.000000e+00 : f32
    %41 = vector.broadcast %cst_10 : f32 to vector<8x128xf32>
    %42 = arith.subf %41, %40 : vector<8x128xf32>
    %cst_11 = arith.constant 1.000000e+02 : f32
    %43 = vector.broadcast %cst_11 : f32 to vector<8x128xf32>
    %44 = arith.mulf %42, %43 : vector<8x128xf32>
    %45 = math.exp %44 : vector<8x128xf32>
    %46 = math.log1p %45 : vector<8x128xf32>
    %cst_12 = arith.constant 0.00999999977 : f32
    %47 = vector.broadcast %cst_12 : f32 to vector<8x128xf32>
    %48 = arith.mulf %47, %46 : vector<8x128xf32>
    %49 = arith.subf %38, %48 : vector<8x128xf32>
    %50 = arith.subf %49, %37 : vector<8x128xf32>
    %cst_13 = arith.constant 0.0115443133 : f32
    %51 = vector.broadcast %cst_13 : f32 to vector<8x128xf32>
    %52 = arith.subf %50, %51 : vector<8x128xf32>
    %cst_14 = arith.constant 0.000000e+00 : f32
    %53 = vector.broadcast %cst_14 : f32 to vector<8x128xf32>
    %54 = arith.maximumf %52, %53 : vector<8x128xf32>
    %55 = math.absf %52 : vector<8x128xf32>
    %cst_15 = arith.constant 0.000000e+00 : f32
    %56 = vector.broadcast %cst_15 : f32 to vector<8x128xf32>
    %57 = arith.subf %56, %55 : vector<8x128xf32>
    %58 = math.exp %57 : vector<8x128xf32>
    %59 = math.log1p %58 : vector<8x128xf32>
    %60 = arith.addf %54, %59 : vector<8x128xf32>
    %cst_16 = arith.constant 1.17549435E-38 : f32
    %61 = vector.broadcast %cst_16 : f32 to vector<8x128xf32>
    %62 = arith.maximumf %60, %61 : vector<8x128xf32>
    %63 = math.log %62 : vector<8x128xf32>
    %cst_17 = arith.constant dense<0.000000e+00> : vector<8xf32>
    %64 = vector.multi_reduction <add>, %63, %cst_17 [1] : vector<8x128xf32> to vector<8xf32>
    %65 = vector.shape_cast %64 : vector<8xf32> to vector<8x1xf32>
    %cst_18 = arith.constant 0.0115443133 : f32
    %66 = vector.broadcast %cst_18 : f32 to vector<8x128xf32>
    %67 = arith.subf %24, %66 : vector<8x128xf32>
    %cst_19 = arith.constant 0.000000e+00 : f32
    %68 = vector.broadcast %cst_19 : f32 to vector<8x128xf32>
    %69 = arith.maximumf %67, %68 : vector<8x128xf32>
    %70 = math.absf %67 : vector<8x128xf32>
    %cst_20 = arith.constant 0.000000e+00 : f32
    %71 = vector.broadcast %cst_20 : f32 to vector<8x128xf32>
    %72 = arith.subf %71, %70 : vector<8x128xf32>
    %73 = math.exp %72 : vector<8x128xf32>
    %74 = math.log1p %73 : vector<8x128xf32>
    %75 = arith.addf %69, %74 : vector<8x128xf32>
    %cst_21 = arith.constant 1.17549435E-38 : f32
    %76 = vector.broadcast %cst_21 : f32 to vector<8x128xf32>
    %77 = arith.maximumf %75, %76 : vector<8x128xf32>
    %78 = math.log %77 : vector<8x128xf32>
    %cst_22 = arith.constant dense<0.000000e+00> : vector<8xf32>
    %79 = vector.multi_reduction <add>, %78, %cst_22 [1] : vector<8x128xf32> to vector<8xf32>
    %80 = vector.shape_cast %79 : vector<8xf32> to vector<8x1xf32>
    %81 = arith.divf %65, %80 : vector<8x1xf32>
    %c0_23 = arith.constant 0 : index
    %c0_24 = arith.constant 0 : index
    %82 = vector.load %arg5[%c0_23, %c0_24] : memref<8x1xf32, #tpu.memory_space<vmem>>, vector<8x1xf32>
    tpu.vector_store %arg5[%c0_23, %c0_24], %81 {strides = array<i32>} : memref<8x1xf32, #tpu.memory_space<vmem>>, vector<8x1xf32>,
    return
  }
  func.func @transform_0(%arg0: i32) -> (i32, i32) {
    %c0_i32 = arith.constant 0 : i32
    %c0_i32_0 = arith.constant 0 : i32
    return %arg0, %c0_i32 : i32, i32
  }
  func.func @transform_1(%arg0: i32) -> (i32, i32) {
    %c0_i32 = arith.constant 0 : i32
    %c0_i32_0 = arith.constant 0 : i32
    return %arg0, %c0_i32 : i32, i32
  }
  func.func @transform_2(%arg0: i32) -> (i32, i32) {
    %c0_i32 = arith.constant 0 : i32
    %c0_i32_0 = arith.constant 0 : i32
    return %arg0, %c0_i32 : i32, i32
  }
  func.func @transform_3(%arg0: i32) -> (i32, i32) {
    %c0_i32 = arith.constant 0 : i32
    %c0_i32_0 = arith.constant 0 : i32
    %c0_i32_1 = arith.constant 0 : i32
    return %c0_i32, %c0_i32_0 : i32, i32
  }
  func.func @transform_4(%arg0: i32) -> (i32, i32) {
    %c0_i32 = arith.constant 0 : i32
    %c0_i32_0 = arith.constant 0 : i32
    return %arg0, %c0_i32 : i32, i32
  }
}

</mosaic_0001>

<llo_original>
// kernel: tpu_custom_call.1
$region0: #{tpu_custom_call.1}
  #allocation0 [shape = 'u32[]', space=smem, size = 0x4, offset = 0x4, fixed_abs, tag = 'smem constant byte address 0x4 - core index']
  #allocation1 [shape = 'u32[144,128]{1,0:T(1,128)}', space=vmem, size = 0x12000, scoped, tag = 'internal scratch']
  %s0 = inlined_call_operand.hbm [shape: f32[12,256], index: 0, kind: input, shape index: {}]
  %s1 = inlined_call_operand.hbm [shape: f32[12,256], index: 1, kind: input, shape index: {}]
  %s2 = inlined_call_operand.vmem [shape: s32[12,1], index: 2, kind: input, shape index: {}]
  %s3 = inlined_call_operand.hbm [shape: f32[16,512], index: 3, kind: input, shape index: {}]
  %s4 = inlined_call_operand.vmem [shape: f32[12,1], index: 4, kind: output, shape index: {}]
  %s5 = sld [smem:[#allocation0]]
  $region61: #{tpu_custom_call.1} parent=0
    _
  %s7 = ssub.s32 1, %s5
  %s8 = scalar_select 0, %s7, %s5
  $region1: #{tpu_custom_call.1} parent=0
    #allocation2 [shape = 'u8[16384]{0}', space=vmem, size = 0x4000, scoped, tag = 'input window, operand 0']
    #allocation3 [shape = 's32[2]{0}', space=sflag, size = 0x8, scoped, tag = 'scoped memory for tpu_custom_call.1']
    #allocation4 [shape = 'u8[16384]{0}', space=vmem, size = 0x4000, scoped, tag = 'input window, operand 1']
    #allocation5 [shape = 's32[2]{0}', space=sflag, size = 0x8, scoped, tag = 'scoped memory for tpu_custom_call.1']
    #allocation6 [shape = 'u8[32768]{0}', space=vmem, size = 0x8000, scoped, tag = 'input window, operand 3, single buffered']
    %9 = vsyncpa [#allocation3], 0
    %s10 = scalar_lea.sflag [#allocation3], 1
    %11 = vsyncpa %s10, 0
    %12 = vsyncpa [#allocation5], 0
    %s13 = scalar_lea.sflag [#allocation5], 1
    %14 = vsyncpa %s13, 0
    loop: start=0, step=1, limit=4
    $region2: #{tpu_custom_call.1} parent=1 // loop_pre_header
      _
    $region3: #{tpu_custom_call.1} parent=1 // loop_header
      %s16 = sphi 0, %s20
      %p17 = scmp.ge.s32.totalorder %s16, 4
      %s26 = sphi 0, %s28
      %s29 = sphi 0, %s26
      %s30 = sphi 0, %s29
      %s46 = sphi 0, %s30
      %s52 = sphi 0, %s54
      %s55 = sphi 0, %s52
      %s56 = sphi 0, %s55
      %s72 = sphi 0, %s56
      %s78 = sphi 0, %s80
      %s81 = sphi 0, %s78
      %s82 = sphi 0, %s81
      %s98 = sphi 0, %s82
      %s102 = sphi 0, %s102
      %s104 = sphi 0, %s102
      %s105 = sphi 0, %s104
      %s119 = sphi 0, %s105
      %s125 = sphi 0, %s127
      %s128 = sphi 0, %s125
      %s129 = sphi 0, %s128
      %s145 = sphi 0, %s129
    $region4: #{tpu_custom_call.1} parent=1 // loop_header_branch
      %19 = sbr.rel (%p17) target = $region8
    $region5: #{tpu_custom_call.1} parent=1 // loop_body
      %s21 = ssub.s32 %s16, 1
      %s22 = ssub.s32 %s16, 2
      %s23 = sadd.s32 %s16, 1
      %s24 = ssub.s32 %s16, %s23
      %p25 = scmp.eq.s32.totalorder %s24, 0
      %s27 = sadd.s32 %s26, 1
      %s28 = scalar_select %p25, %s26, %s27
      %p31 = pneg %p25
      %p32 = scmp.eq.s32.totalorder %s16, 1
      %p33 = por %p31, %p32
      %p34 = scmp.ne.s32.totalorder %s26, %s29
      %p35 = scmp.eq.s32.totalorder %s16, 0
      %p36 = por %p34, %p35
      %p37 = scmp.ne.s32.totalorder %s26, %s29
      %p38 = scmp.eq.s32.totalorder %s21, 1
      %p39 = por %p37, %p38
      %p40 = scmp.ne.s32.totalorder %s29, %s30
      %p41 = scmp.eq.s32.totalorder %s21, 0
      %p42 = por %p40, %p41
      %p43 = scmp.ne.s32.totalorder %s29, %s30
      %p44 = scmp.eq.s32.totalorder %s22, 1
      %p45 = por %p43, %p44
      %p47 = scmp.ne.s32.totalorder %s30, %s46
      %p48 = scmp.eq.s32.totalorder %s22, 0
      %p49 = por %p47, %p48
      %s50 = ssub.s32 %s16, %s23
      %p51 = scmp.eq.s32.totalorder %s50, 0
      %s53 = sadd.s32 %s52, 1
      %s54 = scalar_select %p51, %s52, %s53
      %p57 = pneg %p51
      %p58 = scmp.eq.s32.totalorder %s16, 1
      %p59 = por %p57, %p58
      %p60 = scmp.ne.s32.totalorder %s52, %s55
      %p61 = scmp.eq.s32.totalorder %s16, 0
      %p62 = por %p60, %p61
      %p63 = scmp.ne.s32.totalorder %s52, %s55
      %p64 = scmp.eq.s32.totalorder %s21, 1
      %p65 = por %p63, %p64
      %p66 = scmp.ne.s32.totalorder %s55, %s56
      %p67 = scmp.eq.s32.totalorder %s21, 0
      %p68 = por %p66, %p67
      %p69 = scmp.ne.s32.totalorder %s55, %s56
      %p70 = scmp.eq.s32.totalorder %s22, 1
      %p71 = por %p69, %p70
      %p73 = scmp.ne.s32.totalorder %s56, %s72
      %p74 = scmp.eq.s32.totalorder %s22, 0
      %p75 = por %p73, %p74
      %s76 = ssub.s32 %s16, %s23
      %p77 = scmp.eq.s32.totalorder %s76, 0
      %s79 = sadd.s32 %s78, 1
      %s80 = scalar_select %p77, %s78, %s79
      %p83 = pneg %p77
      %p84 = scmp.eq.s32.totalorder %s16, 1
      %p85 = por %p83, %p84
      %p86 = scmp.ne.s32.totalorder %s78, %s81
      %p87 = scmp.eq.s32.totalorder %s16, 0
      %p88 = por %p86, %p87
      %p89 = scmp.ne.s32.totalorder %s78, %s81
      %p90 = scmp.eq.s32.totalorder %s21, 1
      %p91 = por %p89, %p90
      %p92 = scmp.ne.s32.totalorder %s81, %s82
      %p93 = scmp.eq.s32.totalorder %s21, 0
      %p94 = por %p92, %p93
      %p95 = scmp.ne.s32.totalorder %s81, %s82
      %p96 = scmp.eq.s32.totalorder %s22, 1
      %p97 = por %p95, %p96
      %p99 = scmp.ne.s32.totalorder %s82, %s98
      %p100 = scmp.eq.s32.totalorder %s22, 0
      %p101 = por %p99, %p100
      %s103 = sadd.s32 %s102, 1
      %p106 = scmp.eq.s32.totalorder %s16, 1
      %p107 = scmp.ne.s32.totalorder %s102, %s104
      %p108 = scmp.eq.s32.totalorder %s16, 0
      %p109 = por %p107, %p108
      %p110 = scmp.ne.s32.totalorder %s102, %s104
      %p111 = scmp.eq.s32.totalorder %s21, 1
      %p112 = por %p110, %p111
      %p113 = scmp.ne.s32.totalorder %s104, %s105
      %p114 = scmp.eq.s32.totalorder %s21, 0
      %p115 = por %p113, %p114
      %p116 = scmp.ne.s32.totalorder %s104, %s105
      %p117 = scmp.eq.s32.totalorder %s22, 1
      %p118 = por %p116, %p117
      %p120 = scmp.ne.s32.totalorder %s105, %s119
      %p121 = scmp.eq.s32.totalorder %s22, 0
      %p122 = por %p120, %p121
      %s123 = ssub.s32 %s16, %s23
      %p124 = scmp.eq.s32.totalorder %s123, 0
      %s126 = sadd.s32 %s125, 1
      %s127 = scalar_select %p124, %s125, %s126
      %p130 = pneg %p124
      %p131 = scmp.eq.s32.totalorder %s16, 1
      %p132 = por %p130, %p131
      %p133 = scmp.ne.s32.totalorder %s125, %s128
      %p134 = scmp.eq.s32.totalorder %s16, 0
      %p135 = por %p133, %p134
      %p136 = scmp.ne.s32.totalorder %s125, %s128
      %p137 = scmp.eq.s32.totalorder %s21, 1
      %p138 = por %p136, %p137
      %p139 = scmp.ne.s32.totalorder %s128, %s129
      %p140 = scmp.eq.s32.totalorder %s21, 0
      %p141 = por %p139, %p140
      %p142 = scmp.ne.s32.totalorder %s128, %s129
      %p143 = scmp.eq.s32.totalorder %s22, 1
      %p144 = por %p142, %p143
      %p146 = scmp.ne.s32.totalorder %s129, %s145
      %p147 = scmp.eq.s32.totalorder %s22, 0
      %p148 = por %p146, %p147
      %p149 = scmp.le.s32.totalorder 1, %s16
      %p150 = scmp.lt.s32.totalorder %s16, 3
      %p151 = pnand %p149, %p150
      %p152 = pneg %p151
      // Predicated region
      $region9: #{tpu_custom_call.1} parent=5 // pred_check
        _
      $region10: #{tpu_custom_call.1} parent=5 // pred_check_branch
        %154 = sbr.rel (%p151) target = $region12
      $region11: #{tpu_custom_call.1} parent=5 // pred_region
        %s155 = ssub.s32 %s16, 1
        // Predicated region
        $region13: #{tpu_custom_call.1} parent=11 // pred_check
          %p156 = pneg %p115
        $region14: #{tpu_custom_call.1} parent=11 // pred_check_branch
          %158 = sbr.rel (%p156) target = $region16
        $region15: #{tpu_custom_call.1} parent=11 // pred_region
          %s160 = ssub.s32 1024, 1024
          %161 = vsyncadd [#allocation5], %s160
          %s162 = sshll.u32 [#allocation6], 4
          %s163 = int_to_ptr.vmem [resolvable:$true] %s162
          %168 = dma.hbm_to_vmem [thread:$0]  %s3, 1024, %s163, [#allocation5], 512, 512, 32
        $region16: #{tpu_custom_call.1} parent=11 // pred_fallthru
          _
      $region12: #{tpu_custom_call.1} parent=5 // pred_fallthru
        _
      %p169 = scmp.lt.s32.totalorder %s16, 2
      // Predicated region
      $region17: #{tpu_custom_call.1} parent=5 // pred_check
        %p170 = pneg %p169
      $region18: #{tpu_custom_call.1} parent=5 // pred_check_branch
        %172 = sbr.rel (%p170) target = $region20
      $region19: #{tpu_custom_call.1} parent=5 // pred_region
        // Predicated region
        $region21: #{tpu_custom_call.1} parent=19 // pred_check
          %p173 = pneg %p36
        $region22: #{tpu_custom_call.1} parent=19 // pred_check_branch
          %175 = sbr.rel (%p173) target = $region24
        $region23: #{tpu_custom_call.1} parent=19 // pred_region
          %s176 = sand.u32 %s26, 1
          %s177 = scalar_lea.sflag [#allocation3], %s176
          %s178 = sand.u32 %s26, 1
          %s179 = smul.addr %s178, 16
          %s180 = scalar_lea.vmem [#allocation2], %s179
          %s182 = ssub.s32 256, 256
          %183 = vsyncadd %s177, %s182
          %s184 = smul.addr %s16, 2
          %s185 = smul.addr %s184, 128
          %s186 = scalar_lea.hbm %s0, %s185
          %s188 = sshll.u32 %s180, 4
          %s189 = int_to_ptr.vmem [resolvable:$true] %s188
          %191 = dma.hbm_to_vmem [thread:$0]  %s186, 256, %s189, %s177
        $region24: #{tpu_custom_call.1} parent=19 // pred_fallthru
          _
        // Predicated region
        $region25: #{tpu_custom_call.1} parent=19 // pred_check
          %p192 = pneg %p62
        $region26: #{tpu_custom_call.1} parent=19 // pred_check_branch
          %194 = sbr.rel (%p192) target = $region28
        $region27: #{tpu_custom_call.1} parent=19 // pred_region
          %s195 = sand.u32 %s16, 1
          %s196 = scalar_lea.sflag [#allocation5], %s195
          %s197 = sand.u32 %s52, 1
          %s198 = smul.addr %s197, 16
          %s199 = scalar_lea.vmem [#allocation4], %s198
          %s201 = ssub.s32 256, 256
          %202 = vsyncadd %s196, %s201
          %s203 = smul.addr %s16, 2
          %s204 = smul.addr %s203, 128
          %s205 = scalar_lea.hbm %s1, %s204
          %s207 = sshll.u32 %s199, 4
          %s208 = int_to_ptr.vmem [resolvable:$true] %s207
          %210 = dma.hbm_to_vmem [thread:$0]  %s205, 256, %s208, %s196
        $region28: #{tpu_custom_call.1} parent=19 // pred_fallthru
          _
        // Predicated region
        $region29: #{tpu_custom_call.1} parent=19 // pred_check
          %p211 = pneg %p88
        $region30: #{tpu_custom_call.1} parent=19 // pred_check_branch
          %213 = sbr.rel (%p211) target = $region32
        $region31: #{tpu_custom_call.1} parent=19 // pred_region
          %p214 = scmp.lt.s32.totalorder %s16, 1
          %s215 = scalar_select %p214, %s16, 1
          %s216 = smul.addr %s215, 8
          %s217 = scalar_lea.vmem %s2, %s216
        $region32: #{tpu_custom_call.1} parent=19 // pred_fallthru
          _
      $region20: #{tpu_custom_call.1} parent=5 // pred_fallthru
        _
      %p218 = scmp.le.s32.totalorder 1, %s16
      %p219 = scmp.lt.s32.totalorder %s16, 3
      %p220 = pnand %p218, %p219
      %p221 = pneg %p220
      // Predicated region
      $region33: #{tpu_custom_call.1} parent=5 // pred_check
        _
      $region34: #{tpu_custom_call.1} parent=5 // pred_check_branch
        %223 = sbr.rel (%p220) target = $region36
      $region35: #{tpu_custom_call.1} parent=5 // pred_region
        %s224 = ssub.s32 %s16, 1
        %s225 = sand.u32 %s29, 1
        %s226 = scalar_lea.sflag [#allocation3], %s225
        %s227 = sand.u32 %s29, 1
        %s228 = smul.addr %s227, 16
        %s229 = scalar_lea.vmem [#allocation2], %s228
        // Predicated region
        $region37: #{tpu_custom_call.1} parent=35 // pred_check
          %p230 = pneg %p42
        $region38: #{tpu_custom_call.1} parent=35 // pred_check_branch
          %232 = sbr.rel (%p230) target = $region40
        $region39: #{tpu_custom_call.1} parent=35 // pred_region
          %233 = dma.done %s226, 256
        $region40: #{tpu_custom_call.1} parent=35 // pred_fallthru
          _
        %s234 = sand.u32 %s21, 1
        %s235 = scalar_lea.sflag [#allocation5], %s234
        %s236 = sand.u32 %s55, 1
        %s237 = smul.addr %s236, 16
        %s238 = scalar_lea.vmem [#allocation4], %s237
        // Predicated region
        $region41: #{tpu_custom_call.1} parent=35 // pred_check
          %p239 = pneg %p68
        $region42: #{tpu_custom_call.1} parent=35 // pred_check_branch
          %241 = sbr.rel (%p239) target = $region44
        $region43: #{tpu_custom_call.1} parent=35 // pred_region
          %242 = dma.done %s235, 256
        $region44: #{tpu_custom_call.1} parent=35 // pred_fallthru
          _
        // Predicated region
        $region45: #{tpu_custom_call.1} parent=35 // pred_check
          %p243 = pneg %p115
        $region46: #{tpu_custom_call.1} parent=35 // pred_check_branch
          %245 = sbr.rel (%p243) target = $region48
        $region47: #{tpu_custom_call.1} parent=35 // pred_region
          %246 = dma.done [#allocation5], 1024
        $region48: #{tpu_custom_call.1} parent=35 // pred_fallthru
          _
        %s247 = sand.u32 %s29, 1
        %s248 = scalar_lea.sflag [#allocation3], %s247
        %s249 = sand.u32 %s29, 1
        %s250 = smul.addr %s249, 16
        %s251 = scalar_lea.vmem [#allocation2], %s250
        %p252 = pneg %p42
        %p253 = pneg %p39
        %s254 = sand.u32 %s21, 1
        %s255 = scalar_lea.sflag [#allocation5], %s254
        %s256 = sand.u32 %s55, 1
        %s257 = smul.addr %s256, 16
        %s258 = scalar_lea.vmem [#allocation4], %s257
        %p259 = pneg %p68
        %p260 = pneg %p65
        %p261 = scmp.lt.s32.totalorder %s21, 1
        %s262 = scalar_select %p261, %s21, 1
        %s263 = smul.addr %s262, 8
        %s264 = scalar_lea.vmem %s2, %s263
        %p265 = pneg %p94
        %p266 = pneg %p91
        %p267 = pneg %p115
        %p268 = pneg %p112
        %p269 = pneg %p141
        %p270 = pneg %p138
        %p271 = scmp.lt.s32.totalorder %s21, 1
        %s272 = scalar_select %p271, %s21, 1
        %s273 = smul.addr %s272, 8
        %s274 = scalar_lea.vmem %s4, %s273
        %p275 = scmp.lt.s32.totalorder %s21, 1
        %s276 = scalar_select %p275, %s21, 1
        %s277 = smul.addr %s276, 8
        %s278 = scalar_lea.vmem %s2, %s277
        %p279 = scmp.lt.s32.totalorder %s21, 1
        %s280 = scalar_select %p279, %s21, 1
        %s281 = smul.addr %s280, 8
        %s282 = scalar_lea.vmem %s4, %s281
        %v283 = vld [vmem:[%s229] sm:$0xff]
        %v284 = vld [vmem:[%s229 + $0x8] sm:$0xff]
        %v285 = vld [vmem:[%s238] sm:$0xff]
        %v286 = vld [vmem:[%s238 + $0x8] sm:$0xff]
        %v287 = vld [vmem:[%s278] sm:$0xff]
        %v288 = vlaneseq
        %v289 = vand.u32 %v288, 127
        %290 = vset.pattern.permute.xlu0 0
        %291 = vperm.xlu0 %290, %v287
        %v292 = vpop.permute.xlu0 %291
        %vm293 = vcmp.eq.s32.totalorder %v292, %v289
        %v294 = vsel %vm293, 1, 0
        %v295 = vcvt.s32.f32 %v294
        %v296 = vld [vmem:[#allocation6] sm:$0xff]
        %v297 = vld [vmem:[#allocation6 + $0x8] sm:$0xff]
        %v298 = vld [vmem:[#allocation6 + $0x10] sm:$0xff]
        %v299 = vld [vmem:[#allocation6 + $0x18] sm:$0xff]
        %v300 = vld [vmem:[#allocation6 + $0x20] sm:$0xff]
        %v301 = vld [vmem:[#allocation6 + $0x28] sm:$0xff]
        %v302 = vld [vmem:[#allocation6 + $0x30] sm:$0xff]
        %v303 = vld [vmem:[#allocation6 + $0x38] sm:$0xff]
        %vm304 = vcmask 130048
        %v306 = vsel %vm304, %v295, 0
        %308 = vmatprep.subr.mxu0 0.0
        %309 = vmatpush1.msra.mxu0 0.0
        %310 = vmatprep.subr.mxu0 0.0
        %311 = vmatpush1.msra.mxu0 0.0
        %312 = vmatprep.subr.mxu0 0.0
        %313 = vmatpush1.msra.mxu0 0.0
        %314 = vmatprep.subr.mxu0 0.0
        %315 = vmatpush1.msra.mxu0 0.0
        %316 = vmatprep.subr.mxu0 0.0
        %317 = vmatpush1.msra.mxu0 0.0
        %318 = vmatprep.subr.mxu0 0.0
        %319 = vmatpush1.msra.mxu0 0.0
        %320 = vmatprep.subr.mxu0 0.0
        %321 = vmatpush1.msra.mxu0 0.0
        %322 = vmatprep.subr.mxu0 0.0
        %323 = vmatpush1.msra.mxu0 0.0
        %324 = vmatprep.subr.mxu0 0.0
        %325 = vmatpush1.msra.mxu0 0.0
        %326 = vmatprep.subr.mxu0 0.0
        %327 = vmatpush1.msra.mxu0 0.0
        %328 = vmatprep.subr.mxu0 0.0
        %329 = vmatpush1.msra.mxu0 0.0
        %330 = vmatprep.subr.mxu0 0.0
        %331 = vmatpush1.msra.mxu0 0.0
        %332 = vmatprep.subr.mxu0 0.0
        %333 = vmatpush1.msra.mxu0 0.0
        %334 = vmatprep.subr.mxu0 0.0
        %335 = vmatpush1.msra.mxu0 0.0
        %336 = vmatprep.subr.mxu0 %v301
        %337 = vmatpush1.msra.mxu0 %v300
        %338 = vmatprep.subr.mxu0 %v297
        %339 = vmatpush1.msra.mxu0 %v296
        %340 = vmatprep.subr.mxu0 0.0
        %341 = vmatpush2.msra.mxu0 0.0
        %342 = vmatprep.subr.mxu0 0.0
        %343 = vmatpush2.msra.mxu0 0.0
        %344 = vmatprep.subr.mxu0 0.0
        %345 = vmatpush2.msra.mxu0 0.0
        %346 = vmatprep.subr.mxu0 0.0
        %347 = vmatpush2.msra.mxu0 0.0
        %348 = vmatprep.subr.mxu0 0.0
        %349 = vmatpush2.msra.mxu0 0.0
        %350 = vmatprep.subr.mxu0 0.0
        %351 = vmatpush2.msra.mxu0 0.0
        %352 = vmatprep.subr.mxu0 0.0
        %353 = vmatpush2.msra.mxu0 0.0
        %354 = vmatprep.subr.mxu0 0.0
        %355 = vmatpush2.msra.mxu0 0.0
        %356 = vmatprep.subr.mxu0 0.0
        %357 = vmatpush2.msra.mxu0 0.0
        %358 = vmatprep.subr.mxu0 0.0
        %359 = vmatpush2.msra.mxu0 0.0
        %360 = vmatprep.subr.mxu0 0.0
        %361 = vmatpush2.msra.mxu0 0.0
        %362 = vmatprep.subr.mxu0 0.0
        %363 = vmatpush2.msra.mxu0 0.0
        %364 = vmatprep.subr.mxu0 0.0
        %365 = vmatpush2.msra.mxu0 0.0
        %366 = vmatprep.subr.mxu0 0.0
        %367 = vmatpush2.msra.mxu0 0.0
        %368 = vmatprep.subr.mxu0 0.0
        %369 = vmatpush2.msra.mxu0 0.0
        %370 = vmatprep.subr.mxu0 0.0
        %371 = vmatpush2.msra.mxu0 0.0
        %372 = vmatprep.mubr.f32.mxu0 0.0
        %373 = vmatmul.mubr.f32.gmra.mxu0 %v306
        %v374 = vpop.f32.mrf.mxu0
        %v375 = vadd.f32 0.0, %v374
        %v376 = vpop.f32.mrf.mxu0
        %v377 = vadd.f32 0.0, %v376
        %378 = vdwg.mxu0
        %379 = vmatprep.subr.mxu0 0.0
        %380 = vmatpush1.msra.mxu0 0.0
        %381 = vmatprep.subr.mxu0 0.0
        %382 = vmatpush1.msra.mxu0 0.0
        %383 = vmatprep.subr.mxu0 0.0
        %384 = vmatpush1.msra.mxu0 0.0
        %385 = vmatprep.subr.mxu0 0.0
        %386 = vmatpush1.msra.mxu0 0.0
        %387 = vmatprep.subr.mxu0 0.0
        %388 = vmatpush1.msra.mxu0 0.0
        %389 = vmatprep.subr.mxu0 0.0
        %390 = vmatpush1.msra.mxu0 0.0
        %391 = vmatprep.subr.mxu0 0.0
        %392 = vmatpush1.msra.mxu0 0.0
        %393 = vmatprep.subr.mxu0 0.0
        %394 = vmatpush1.msra.mxu0 0.0
        %395 = vmatprep.subr.mxu0 0.0
        %396 = vmatpush1.msra.mxu0 0.0
        %397 = vmatprep.subr.mxu0 0.0
        %398 = vmatpush1.msra.mxu0 0.0
        %399 = vmatprep.subr.mxu0 0.0
        %400 = vmatpush1.msra.mxu0 0.0
        %401 = vmatprep.subr.mxu0 0.0
        %402 = vmatpush1.msra.mxu0 0.0
        %403 = vmatprep.subr.mxu0 0.0
        %404 = vmatpush1.msra.mxu0 0.0
        %405 = vmatprep.subr.mxu0 0.0
        %406 = vmatpush1.msra.mxu0 0.0
        %407 = vmatprep.subr.mxu0 %v303
        %408 = vmatpush1.msra.mxu0 %v302
        %409 = vmatprep.subr.mxu0 %v299
        %410 = vmatpush1.msra.mxu0 %v298
        %411 = vmatprep.subr.mxu0 0.0
        %412 = vmatpush2.msra.mxu0 0.0
        %413 = vmatprep.subr.mxu0 0.0
        %414 = vmatpush2.msra.mxu0 0.0
        %415 = vmatprep.subr.mxu0 0.0
        %416 = vmatpush2.msra.mxu0 0.0
        %417 = vmatprep.subr.mxu0 0.0
        %418 = vmatpush2.msra.mxu0 0.0
        %419 = vmatprep.subr.mxu0 0.0
        %420 = vmatpush2.msra.mxu0 0.0
        %421 = vmatprep.subr.mxu0 0.0
        %422 = vmatpush2.msra.mxu0 0.0
        %423 = vmatprep.subr.mxu0 0.0
        %424 = vmatpush2.msra.mxu0 0.0
        %425 = vmatprep.subr.mxu0 0.0
        %426 = vmatpush2.msra.mxu0 0.0
        %427 = vmatprep.subr.mxu0 0.0
        %428 = vmatpush2.msra.mxu0 0.0
        %429 = vmatprep.subr.mxu0 0.0
        %430 = vmatpush2.msra.mxu0 0.0
        %431 = vmatprep.subr.mxu0 0.0
        %432 = vmatpush2.msra.mxu0 0.0
        %433 = vmatprep.subr.mxu0 0.0
        %434 = vmatpush2.msra.mxu0 0.0
        %435 = vmatprep.subr.mxu0 0.0
        %436 = vmatpush2.msra.mxu0 0.0
        %437 = vmatprep.subr.mxu0 0.0
        %438 = vmatpush2.msra.mxu0 0.0
        %439 = vmatprep.subr.mxu0 0.0
        %440 = vmatpush2.msra.mxu0 0.0
        %441 = vmatprep.subr.mxu0 0.0
        %442 = vmatpush2.msra.mxu0 0.0
        %443 = vmatprep.mubr.f32.mxu0 0.0
        %444 = vmatmul.mubr.f32.gmra.mxu0 %v306
        %v445 = vpop.f32.mrf.mxu0
        %v446 = vadd.f32 0.0, %v445
        %v447 = vpop.f32.mrf.mxu0
        %v448 = vadd.f32 0.0, %v447
        %449 = vdwg.mxu0
        %v450 = vadd.f32 %v283, %v375
        %v451 = vmul.f32 %v284, 1.442695
        %v452 = vpow.pop %v451
        %v453 = vmul.f32 %v452, %v377
        %v454 = vadd.f32 %v450, %v453
        %v455 = vadd.f32 %v285, %v446
        %v456 = vmul.f32 %v286, 1.442695
        %v457 = vpow.pop %v456
        %v458 = vmul.f32 %v457, %v448
        %v459 = vadd.f32 %v455, %v458
        %v460 = vmax.f32 %v450, %v455
        %v461 = vsub.f32 %v450, %v455
        %v462 = vand.u32 2147483647, %v461
        %v463 = vsub.f32 0.0, %v462
        %v464 = vmul.f32 %v463, 100.0
        %v465 = vmul.f32 %v464, 1.442695
        %v466 = vpow.pop %v465
        %v467 = vadd.f32 %v466, 1.0
        %v468 = vlog2.pop %v467
        %v469 = vmul.f32 %v468, 0.6931472
        %v470 = vmul.f32 -0.5, %v466
        %v471 = vadd.f32 %v470, 1.0
        %v472 = vmul.f32 %v471, %v466
        %v473 = vand.u32 2147483647, %v466
        %vm474 = vcmp.lt.f32.partialorder %v473, 0.0004427343
        %v475 = vsel %vm474, %v472, %v469
        %v476 = vmul.f32 %v475, 0.01
        %v477 = vadd.f32 %v460, %v476
        %v478 = vmin.f32 %v454, %v459
        %v479 = vsub.f32 %v454, %v459
        %v480 = vand.u32 2147483647, %v479
        %v481 = vsub.f32 0.0, %v480
        %v482 = vmul.f32 %v481, 100.0
        %v483 = vmul.f32 %v482, 1.442695
        %v484 = vpow.pop %v483
        %v485 = vadd.f32 %v484, 1.0
        %v486 = vlog2.pop %v485
        %v487 = vmul.f32 %v486, 0.6931472
        %v488 = vmul.f32 -0.5, %v484
        %v489 = vadd.f32 %v488, 1.0
        %v490 = vmul.f32 %v489, %v484
        %v491 = vand.u32 2147483647, %v484
        %vm492 = vcmp.lt.f32.partialorder %v491, 0.0004427343
        %v493 = vsel %vm492, %v490, %v487
        %v494 = vmul.f32 %v493, 0.01
        %v495 = vsub.f32 %v478, %v494
        %v496 = vsub.f32 %v495, %v477
        %v497 = vsub.f32 %v496, 0.011544313
        %v498 = vmax.f32 %v497, 0.0
        %v499 = vand.u32 2147483647, %v497
        %v500 = vsub.f32 0.0, %v499
        %v501 = vmul.f32 %v500, 1.442695
        %v502 = vpow.pop %v501
        %v503 = vadd.f32 %v502, 1.0
        %v504 = vlog2.pop %v503
        %v505 = vmul.f32 %v504, 0.6931472
        %v506 = vmul.f32 -0.5, %v502
        %v507 = vadd.f32 %v506, 1.0
        %v508 = vmul.f32 %v507, %v502
        %v509 = vand.u32 2147483647, %v502
        %vm510 = vcmp.lt.f32.partialorder %v509, 0.0004427343
        %v511 = vsel %vm510, %v508, %v505
        %v512 = vadd.f32 %v498, %v511
        %v513 = vmax.f32 %v512, 1.1754944e-38
        %v514 = vlog2.pop %v513
        %v515 = vmul.f32 %v514, 0.6931472
        %516 = vadd.xlane.f32.xlu0 %v515
        %v517 = vpop.xlane.xlu0 %516
        %v518 = vsub.f32 %v458, 0.011544313
        %v519 = vmax.f32 %v518, 0.0
        %v520 = vand.u32 2147483647, %v518
        %v521 = vsub.f32 0.0, %v520
        %v522 = vmul.f32 %v521, 1.442695
        %v523 = vpow.pop %v522
        %v524 = vadd.f32 %v523, 1.0
        %v525 = vlog2.pop %v524
        %v526 = vmul.f32 %v525, 0.6931472
        %v527 = vmul.f32 -0.5, %v523
        %v528 = vadd.f32 %v527, 1.0
        %v529 = vmul.f32 %v528, %v523
        %v530 = vand.u32 2147483647, %v523
        %vm531 = vcmp.lt.f32.partialorder %v530, 0.0004427343
        %v532 = vsel %vm531, %v529, %v526
        %v533 = vadd.f32 %v519, %v532
        %v534 = vmax.f32 %v533, 1.1754944e-38
        %v535 = vlog2.pop %v534
        %v536 = vmul.f32 %v535, 0.6931472
        %537 = vadd.xlane.f32.xlu0 %v536
        %v538 = vpop.xlane.xlu0 %537
        %v539 = vrcp.pop %v538
        %v540 = vmul.f32 %v517, %v539
        %vm541 = vcmask 7168
        %542 = vst.msk [vmem:[%s282] sm:$0xff] %vm541, %v540
        %p543 = scmp.lt.s32.totalorder %s21, 1
        %s544 = scalar_select %p543, %s21, 1
        %s545 = smul.addr %s544, 8
        %s546 = scalar_lea.vmem %s4, %s545
        // Predicated region
        $region49: #{tpu_custom_call.1} parent=35 // pred_check
          %p547 = pneg %p138
        $region50: #{tpu_custom_call.1} parent=35 // pred_check_branch
          %549 = sbr.rel (%p547) target = $region52
        $region51: #{tpu_custom_call.1} parent=35 // pred_region
          _
        $region52: #{tpu_custom_call.1} parent=35 // pred_fallthru
          _
      $region36: #{tpu_custom_call.1} parent=5 // pred_fallthru
        _
      %p550 = scmp.le.s32.totalorder 2, %s16
      // Predicated region
      $region53: #{tpu_custom_call.1} parent=5 // pred_check
        %p551 = pneg %p550
      $region54: #{tpu_custom_call.1} parent=5 // pred_check_branch
        %553 = sbr.rel (%p551) target = $region56
      $region55: #{tpu_custom_call.1} parent=5 // pred_region
        %s554 = ssub.s32 %s16, 2
        // Predicated region
        $region57: #{tpu_custom_call.1} parent=55 // pred_check
          %p555 = pneg %p144
        $region58: #{tpu_custom_call.1} parent=55 // pred_check_branch
          %557 = sbr.rel (%p555) target = $region60
        $region59: #{tpu_custom_call.1} parent=55 // pred_region
          %p558 = scmp.lt.s32.totalorder %s22, 1
          %s559 = scalar_select %p558, %s22, 1
          %s560 = smul.addr %s559, 8
          %s561 = scalar_lea.vmem %s4, %s560
        $region60: #{tpu_custom_call.1} parent=55 // pred_fallthru
          _
      $region56: #{tpu_custom_call.1} parent=5 // pred_fallthru
        _
    $region6: #{tpu_custom_call.1} parent=1 // loop_footer
      %s20 = sadd.s32 1, %s16
    $region7: #{tpu_custom_call.1} parent=1 // loop_footer_branch
      %15 = sbr.rel target = $region3
    $region8: #{tpu_custom_call.1} parent=1 // loop_exit
      _
    %562 = vsyncpa [#allocation3], 1
    %s563 = scalar_lea.sflag [#allocation3], 1
    %564 = vsyncpa %s563, 1
    %565 = vsyncpa [#allocation5], 1
    %s566 = scalar_lea.sflag [#allocation5], 1
    %567 = vsyncpa %s566, 1

</llo_original>
